<compile_context>
chip_gen: v5e
topology: v5e:2x2
jax: 0.10.0
libtpu: 0.0.40
codegen_flags: <defaults>
</compile_context>

<pallas_src>
import functools

import jax
import jax.numpy as jnp
from jax import lax
from jax.experimental import pallas as pl
from jax.experimental.pallas import tpu as pltpu

EPS = 1e-12          # torch.nn.functional.normalize default eps
EPS_SQ = EPS * EPS   # clamp on the sum-of-squares == max(||v||, eps) clamp


def _round_up(x, m):
    return (x + m - 1) // m * m


def _sublane_multiple(dtype):
    # Rows per packed sublane group: f32 -> 8, bf16 -> 16, int8/fp8 -> 32.
    return {4: 8, 2: 16, 1: 32}.get(jnp.dtype(dtype).itemsize, 8)


def _vmem_capacity_bytes():
    """Physical VMEM per TensorCore; conservative default if query fails."""
    try:
        info = pltpu.get_tpu_info()
        cap = getattr(info, "vmem_capacity_bytes", None)
        if cap:
            return int(cap)
    except Exception:
        pass
    return 64 * 1024 * 1024  # v7x per-TC VMEM (smallest of v5e/v6e/v7x)


# ---------------------------------------------------------------------------
# Fast path: full K resident in VMEM, grid = (M/tm, N/tn), no accumulator RMW.
# ---------------------------------------------------------------------------
def _fullk_kernel(x_ref, w_ref, o_ref, *, cast_bf16):
    x = x_ref[...]          # (tm, K) in input dtype
    w = w_ref[...]          # (K, tn) in input dtype

    # Sum-of-squares reductions in f32 (v5e has no bf16 VPU path).
    xf = x.astype(jnp.float32)
    wf = w.astype(jnp.float32)
    xss = jnp.sum(xf * xf, axis=1, keepdims=True)   # (tm, 1)
    wss = jnp.sum(wf * wf, axis=0, keepdims=True)   # (1, tn)

    if cast_bf16:
        xd = x.astype(jnp.bfloat16)
        wd = w.astype(jnp.bfloat16)
    else:
        xd, wd = x, w
    acc = jnp.dot(xd, wd, preferred_element_type=jnp.float32)   # MXU, f32 acc

    # 1 / max(||v||, eps) == rsqrt(max(sum_sq, eps^2)); rsqrt runs on the EUP.
    row_scale = lax.rsqrt(jnp.maximum(xss, EPS_SQ))   # (tm, 1)
    col_scale = lax.rsqrt(jnp.maximum(wss, EPS_SQ))   # (1, tn)
    o_ref[...] = (acc * row_scale * col_scale).astype(o_ref.dtype)


# ---------------------------------------------------------------------------
# Fallback: K-tiled accumulation for K too large to keep resident in VMEM.
# NOTE: the k==0 init / k==last finalize gating requires K to stay the LAST
# (fastest-varying) grid axis; do not reorder the grid.
# ---------------------------------------------------------------------------
def _ktiled_kernel(x_ref, w_ref, o_ref, acc_ref, xss_ref, wss_ref, *, cast_bf16):
    k = pl.program_id(2)

    @pl.when(k == 0)
    def _():
        acc_ref[...] = jnp.zeros_like(acc_ref)
        xss_ref[...] = jnp.zeros_like(xss_ref)
        wss_ref[...] = jnp.zeros_like(wss_ref)

    x = x_ref[...]          # (tm, tk)
    w = w_ref[...]          # (tk, tn)
    if cast_bf16:
        xd = x.astype(jnp.bfloat16)
        wd = w.astype(jnp.bfloat16)
    else:
        xd, wd = x, w
    acc_ref[...] += jnp.dot(xd, wd, preferred_element_type=jnp.float32)

    xf = x.astype(jnp.float32)
    wf = w.astype(jnp.float32)
    xss_ref[...] += jnp.sum(xf * xf, axis=1, keepdims=True)   # (tm, 1)
    wss_ref[...] += jnp.sum(wf * wf, axis=0, keepdims=True)   # (1, tn)

    @pl.when(k == pl.num_programs(2) - 1)
    def _():
        row_scale = lax.rsqrt(jnp.maximum(xss_ref[...], EPS_SQ))
        col_scale = lax.rsqrt(jnp.maximum(wss_ref[...], EPS_SQ))
        o_ref[...] = (acc_ref[...] * row_scale * col_scale).astype(o_ref.dtype)


# ---------------------------------------------------------------------------
# Wrapper
# ---------------------------------------------------------------------------
def normed_linear(x, weight, *, cast_to_bf16=False, tm_max=512, tn_max=2048,
                  force_k_tile=None):
    """x: (N, in_features), weight: (in_features, out_features) -> (N, out_features)."""
    m, kdim = x.shape
    kdim_w, n = weight.shape
    assert kdim == kdim_w
    out_dtype = x.dtype

    in_isz = jnp.dtype(x.dtype).itemsize
    out_isz = jnp.dtype(out_dtype).itemsize
    sub = _sublane_multiple(x.dtype)

    m_pad = _round_up(m, sub)
    k_pad = _round_up(kdim, 128)
    n_pad = _round_up(n, 128)

    # VMEM budget, re-derived per generation (v7x: 64 MiB phys -> ~48 MiB
    # scoped / ~36 MiB tile budget; v5e/v6e: 128 MiB -> ~96 / ~72 MiB).
    vmem_limit = min(_vmem_capacity_bytes() * 3 // 4, 100 * 1024 * 1024)
    budget = vmem_limit * 3 // 4

    def _pad(a, rows, cols):
        r, c = a.shape
        if (rows, cols) == (r, c):
            return a
        # Zero padding is exact: padded K contributes 0 to both the dot
        # products and the sum-of-squares; padded rows/cols are sliced off.
        # TODO(synk): pre-pad/align the weight once at parameter-init time to
        # avoid this per-call HBM copy when in/out_features are unaligned.
        return jnp.pad(a, ((0, rows - r), (0, cols - c)))

    # ---------------- fast path: full K resident in VMEM ------------------
    def fullk_bytes(tm, tn):
        # double-buffered in/out tiles + f32 temporaries (squares, acc).
        return (2 * (tm * k_pad + k_pad * tn) * in_isz
                + (tm * k_pad + k_pad * tn) * 4
                + 2 * tm * tn * out_isz
                + tm * tn * 4)

    if force_k_tile is None:
        tm = max(sub, min(m_pad, _round_up(tm_max, sub)))
        tn = max(128, min(n_pad, _round_up(tn_max, 128)))
        while fullk_bytes(tm, tn) > budget and tn > 512:
            tn -= 128
        while fullk_bytes(tm, tn) > budget and tm > sub:
            tm -= sub
        while fullk_bytes(tm, tn) > budget and tn > 128:
            tn -= 128
        use_fullk = fullk_bytes(tm, tn) <= budget
    else:
        use_fullk = False

    if use_fullk:
        m_tot = _round_up(m_pad, tm)
        n_tot = _round_up(n_pad, tn)
        k_tot = k_pad
        xp = _pad(x, m_tot, k_tot)
        wp = _pad(weight, k_tot, n_tot)
        grid = (m_tot // tm, n_tot // tn)

        cost = pl.CostEstimate(
            flops=2 * m_tot * n_tot * k_tot,
            transcendentals=m_tot + n_tot,
            bytes_accessed=(xp.size * in_isz * grid[1]
                            + wp.size * in_isz * grid[0]
                            + m_tot * n_tot * out_isz),
        )
        out_padded = pl.pallas_call(
            functools.partial(_fullk_kernel, cast_bf16=cast_to_bf16),
            out_shape=jax.ShapeDtypeStruct((m_tot, n_tot), out_dtype),
            grid_spec=pltpu.PrefetchScalarGridSpec(
                num_scalar_prefetch=0,
                grid=grid,
                in_specs=[
                    pl.BlockSpec((tm, k_tot), lambda i, j: (i, 0)),
                    pl.BlockSpec((k_tot, tn), lambda i, j: (0, j)),
                ],
                out_specs=pl.BlockSpec((tm, tn), lambda i, j: (i, j)),
            ),
            compiler_params=pltpu.CompilerParams(
                # Both axes parallel: j-axis sharding keeps the second v7x TC
                # busy even when M is a single block (small batch).
                dimension_semantics=("parallel", "parallel"),
                vmem_limit_bytes=int(vmem_limit),
            ),
            cost_estimate=cost,
        )(xp, wp)
        return out_padded[:m, :n]

    # ---------------- fallback: K-tiled accumulation -----------------------
    tm = max(sub, min(m_pad, _round_up(tm_max, sub)))
    tn = max(128, min(n_pad, 512))
    tk = 1024 if force_k_tile is None else force_k_tile
    tk = max(128, min(_round_up(tk, 128), k_pad))

    def ktiled_bytes(tm, tn, tk):
        return (2 * (tm * tk + tk * tn) * in_isz        # double-buffered inputs
                + (tm * tk + tk * tn) * 4               # f32 temporaries
                + tm * tn * 4                           # acc scratch
                + 2 * tm * tn * out_isz                 # double-buffered output
                + tm * 128 * 4 + 8 * tn * 4)            # xss / wss scratch (padded)

    while ktiled_bytes(tm, tn, tk) > budget and tk > 256:
        tk -= 128
    while ktiled_bytes(tm, tn, tk) > budget and tn > 128:
        tn -= 128
    while ktiled_bytes(tm, tn, tk) > budget and tm > sub:
        tm -= sub
    while ktiled_bytes(tm, tn, tk) > budget and tk > 128:
        tk -= 128

    m_tot = _round_up(m_pad, tm)
    n_tot = _round_up(n_pad, tn)
    k_tot = _round_up(k_pad, tk)
    xp = _pad(x, m_tot, k_tot)
    wp = _pad(weight, k_tot, n_tot)
    grid = (m_tot // tm, n_tot // tn, k_tot // tk)

    cost = pl.CostEstimate(
        flops=2 * m_tot * n_tot * k_tot,
        transcendentals=m_tot + n_tot,
        bytes_accessed=(xp.size * in_isz * grid[1]
                        + wp.size * in_isz * grid[0]
                        + m_tot * n_tot * out_isz),
    )
    out_padded = pl.pallas_call(
        functools.partial(_ktiled_kernel, cast_bf16=cast_to_bf16),
        out_shape=jax.ShapeDtypeStruct((m_tot, n_tot), out_dtype),
        grid_spec=pltpu.PrefetchScalarGridSpec(
            num_scalar_prefetch=0,
            grid=grid,
            in_specs=[
                pl.BlockSpec((tm, tk), lambda i, j, k: (i, k)),
                pl.BlockSpec((tk, tn), lambda i, j, k: (k, j)),
            ],
            out_specs=pl.BlockSpec((tm, tn), lambda i, j, k: (i, j)),
            scratch_shapes=[
                pltpu.VMEM((tm, tn), jnp.float32),  # f32 matmul accumulator
                pltpu.VMEM((tm, 1), jnp.float32),   # per-row sum(x^2)
                pltpu.VMEM((1, tn), jnp.float32),   # per-col sum(w^2)
            ],
        ),
        compiler_params=pltpu.CompilerParams(
            # K (reduction) must stay the last, "arbitrary" axis.
            dimension_semantics=("parallel", "parallel", "arbitrary"),
            vmem_limit_bytes=int(vmem_limit),
        ),
        cost_estimate=cost,
    )(xp, wp)
    return out_padded[:m, :n]


# ---------------------------------------------------------------------------
# Reference / init helpers
# ---------------------------------------------------------------------------
def init_normed_linear_weight(key, in_features, out_features):
    """Deterministic analogue of:
       weight.uniform_(-1, 1).renorm_(2, 1, 1e-5).mul_(1e5)
    (uniform init, each column rescaled so its L2 norm is ~1)."""
    w = jax.random.uniform(
        key, (in_features, out_features), dtype=jnp.float32, minval=-1.0, maxval=1.0
    )
    col_norm = jnp.sqrt(jnp.sum(w * w, axis=0, keepdims=True))
    maxnorm = 1e-5
    scale = jnp.where(col_norm > maxnorm, maxnorm / (col_norm + 1e-7), 1.0)
    return w * scale * 1e5


def normed_linear_ref(x, weight):
    xn = x / jnp.maximum(jnp.sqrt(jnp.sum(x * x, axis=1, keepdims=True)), EPS)
    wn = weight / jnp.maximum(jnp.sqrt(jnp.sum(weight * weight, axis=0, keepdims=True)), EPS)
    return xn @ wn


if __name__ == "__main__":
    key = jax.random.PRNGKey(0)
    keys = jax.random.split(key, 6)

    def check(out, ref, atol, rtol):
        assert out.shape == ref.shape
        assert jnp.allclose(out.astype(jnp.float32), ref.astype(jnp.float32),
                            atol=atol, rtol=rtol)

    # Case 1: tiny classifier-head shapes -> single-tile full-K fast path.
    x1 = jax.random.normal(keys[0], (8, 32), dtype=jnp.float32)
    w1 = init_normed_linear_weight(keys[1], 32, 16)
    o1 = normed_linear(x1, w1)
    jax.block_until_ready(o1)
    check(o1, normed_linear_ref(x1, w1), 1e-5, 1e-5)

    # Case 2: full-K fast path with multiple N blocks (tn capped to 128).
    x2 = jax.random.normal(keys[2], (32, 384), dtype=jnp.float32)
    w2 = init_normed_linear_weight(keys[3], 384, 160)
    o2 = normed_linear(x2, w2, tn_max=128)
    jax.block_until_ready(o2)
    ref2 = normed_linear_ref(x2, w2)
    check(o2, ref2, 1e-5, 1e-5)

    # Case 3: forced K-tiled fallback (3 K steps, accumulator path), same data.
    o3 = normed_linear(x2, w2, force_k_tile=128)
    jax.block_until_ready(o3)
    check(o3, ref2, 1e-5, 1e-5)

    # Case 4: bf16 inputs (bf16 MXU operands, 16-row sublane rounding).
    x4 = jax.random.normal(keys[4], (16, 256), dtype=jnp.float32).astype(jnp.bfloat16)
    w4 = init_normed_linear_weight(keys[5], 256, 128).astype(jnp.bfloat16)
    o4 = normed_linear(x4, w4)
    jax.block_until_ready(o4)
    ref4 = normed_linear_ref(x4.astype(jnp.float32), w4.astype(jnp.float32))
    check(o4, ref4, 2e-2, 2e-2)

    # Case 5: f32 inputs with opt-in bf16 MXU operands (compute-bound regime).
    o5 = normed_linear(x2, w2, cast_to_bf16=True)
    jax.block_until_ready(o5)
    check(o5, ref2, 2e-2, 2e-2)

    print("KERNEL_OK")
</pallas_src>

<mosaic_0001>
module attributes {stable_mosaic.version = 11 : i64} {
  func.func @_fullk_kernel(%arg0: i32, %arg1: i32, %arg2: memref<8x128xf32, #tpu.memory_space<vmem>>, %arg3: memref<128x128xf32, #tpu.memory_space<vmem>>, %arg4: memref<8x128xf32, #tpu.memory_space<vmem>>) attributes {dimension_semantics = [#tpu.dimension_semantics<parallel>, #tpu.dimension_semantics<parallel>], iteration_bounds = array<i64: 1, 1>, scalar_prefetch = 0 : i64, scratch_operands = 0 : i64, tpu.core_type = #tpu.core_type<tc>, window_params = [{transform_indices = @transform_0, window_bounds = array<i64: 8, 128>}, {transform_indices = @transform_1, window_bounds = array<i64: 128, 128>}, {transform_indices = @transform_2, window_bounds = array<i64: 8, 128>}]} {
    %c0 = arith.constant 0 : index
    %c0_0 = arith.constant 0 : index
    %0 = vector.load %arg2[%c0, %c0_0] : memref<8x128xf32, #tpu.memory_space<vmem>>, vector<8x128xf32>
    %c0_1 = arith.constant 0 : index
    %c0_2 = arith.constant 0 : index
    %1 = vector.load %arg3[%c0_1, %c0_2] : memref<128x128xf32, #tpu.memory_space<vmem>>, vector<128x128xf32>
    %2 = arith.mulf %0, %0 : vector<8x128xf32>
    %cst = arith.constant dense<0.000000e+00> : vector<8xf32>
    %3 = vector.multi_reduction <add>, %2, %cst [1] : vector<8x128xf32> to vector<8xf32>
    %4 = vector.shape_cast %3 : vector<8xf32> to vector<8x1xf32>
    %5 = arith.mulf %1, %1 : vector<128x128xf32>
    %cst_3 = arith.constant dense<0.000000e+00> : vector<128xf32>
    %6 = vector.multi_reduction <add>, %5, %cst_3 [0] : vector<128x128xf32> to vector<128xf32>
    %7 = vector.shape_cast %6 : vector<128xf32> to vector<1x128xf32>
    %cst_4 = arith.constant dense<0.000000e+00> : vector<8x128xf32>
    %8 = tpu.matmul %0, %1, %cst_4 {dimension_numbers = #tpu.dot_dimension_numbers<[1], [0], [0], [1], [0, 0, 1, 1], [], []>} : vector<8x128xf32>, vector<128x128xf32>, vector<8x128xf32> -> vector<8x128xf32>
    %cst_5 = arith.constant 1.000000e-24 : f32
    %9 = vector.broadcast %cst_5 : f32 to vector<8x1xf32>
    %10 = arith.maximumf %4, %9 : vector<8x1xf32>
    %11 = math.rsqrt %10 : vector<8x1xf32>
    %cst_6 = arith.constant 1.000000e-24 : f32
    %12 = vector.broadcast %cst_6 : f32 to vector<1x128xf32>
    %13 = arith.maximumf %7, %12 : vector<1x128xf32>
    %14 = math.rsqrt %13 : vector<1x128xf32>
    %15 = vector.broadcast %11 : vector<8x1xf32> to vector<8x128xf32>
    %16 = arith.mulf %8, %15 : vector<8x128xf32>
    %17 = vector.broadcast %14 : vector<1x128xf32> to vector<8x128xf32>
    %18 = arith.mulf %16, %17 : vector<8x128xf32>
    %c0_7 = arith.constant 0 : index
    %c0_8 = arith.constant 0 : index
    %19 = vector.load %arg4[%c0_7, %c0_8] : memref<8x128xf32, #tpu.memory_space<vmem>>, vector<8x128xf32>
    tpu.vector_store %arg4[%c0_7, %c0_8], %18 {strides = array<i32>} : memref<8x128xf32, #tpu.memory_space<vmem>>, vector<8x128xf32>,
    return
  }
  func.func @transform_0(%arg0: i32, %arg1: i32) -> (i32, i32) {
    %c0_i32 = arith.constant 0 : i32
    %c0_i32_0 = arith.constant 0 : i32
    return %arg0, %c0_i32 : i32, i32
  }
  func.func @transform_1(%arg0: i32, %arg1: i32) -> (i32, i32) {
    %c0_i32 = arith.constant 0 : i32
    %c0_i32_0 = arith.constant 0 : i32
    return %c0_i32, %arg1 : i32, i32
  }
  func.func @transform_2(%arg0: i32, %arg1: i32) -> (i32, i32) {
    %c0_i32 = arith.constant 0 : i32
    return %arg0, %arg1 : i32, i32
  }
}

</mosaic_0001>

<llo_original>
// kernel: tpu_custom_call.1
$region0: #{tpu_custom_call.1}
  #allocation0 [shape = 'u32[]', space=smem, size = 0x4, offset = 0x4, fixed_abs, tag = 'smem constant byte address 0x4 - core index']
  #allocation1 [shape = 'u32[72,128]{1,0:T(1,128)}', space=vmem, size = 0x9000, scoped, tag = 'internal scratch']
  %s0 = inlined_call_operand.hbm [shape: f32[8,128], index: 0, kind: input, shape index: {}]
  %s1 = inlined_call_operand.hbm [shape: f32[128,128], index: 1, kind: input, shape index: {}]
  %s2 = inlined_call_operand.hbm [shape: f32[8,128], index: 2, kind: output, shape index: {}]
  %s3 = sld [smem:[#allocation0]]
  $region26: #{tpu_custom_call.1} parent=0
    _
  %s5 = ssub.s32 1, %s3
  %s6 = scalar_select 0, %s5, %s3
  $region1: #{tpu_custom_call.1} parent=0
    #allocation2 [shape = 'u8[4096]{0}', space=vmem, size = 0x1000, scoped, tag = 'input window, operand 0, single buffered']
    #allocation3 [shape = 's32[1]{0}', space=sflag, size = 0x4, scoped, tag = 'scoped memory for tpu_custom_call.1']
    #allocation4 [shape = 's32[1]{0}', space=sflag, size = 0x4, scoped, tag = 'scoped memory for tpu_custom_call.1']
    #allocation5 [shape = 'u8[65536]{0}', space=vmem, size = 0x10000, scoped, tag = 'input window, operand 1, single buffered']
    #allocation6 [shape = 's32[1]{0}', space=sflag, size = 0x4, scoped, tag = 'scoped memory for tpu_custom_call.1']
    #allocation7 [shape = 'u8[4096]{0}', space=vmem, size = 0x1000, scoped, tag = 'output window, operand 0, single buffered']
    %7 = vsyncpa [#allocation3], 0
    %8 = vsyncpa [#allocation6], 0
    %9 = vsyncpa [#allocation4], 0
    // Predicated region
    $region2: #{tpu_custom_call.1} parent=1 // pred_check
      _
    $region3: #{tpu_custom_call.1} parent=1 // pred_check_branch
      %11 = sbr.rel (0) target = $region5
    $region4: #{tpu_custom_call.1} parent=1 // pred_region
      %13 = vsyncadd [#allocation3], 0
      %s15 = sshll.u32 %s0, 4
      %s16 = int_to_ptr.hbm [resolvable:$true] %s15
      %s17 = sshll.u32 [#allocation2], 4
      %s18 = int_to_ptr.vmem [resolvable:$true] %s17
      %20 = dma.hbm_to_vmem [thread:$0]  %s16, 128, %s18, [#allocation3]
    $region5: #{tpu_custom_call.1} parent=1 // pred_fallthru
      _
    // Predicated region
    $region6: #{tpu_custom_call.1} parent=1 // pred_check
      _
    $region7: #{tpu_custom_call.1} parent=1 // pred_check_branch
      %22 = sbr.rel (0) target = $region9
    $region8: #{tpu_custom_call.1} parent=1 // pred_region
      %24 = vsyncadd [#allocation6], 0
      %s25 = sshll.u32 %s1, 4
      %s26 = int_to_ptr.hbm [resolvable:$true] %s25
      %s27 = sshll.u32 [#allocation5], 4
      %s28 = int_to_ptr.vmem [resolvable:$true] %s27
      %33 = dma.hbm_to_vmem [thread:$0]  %s26, 2048, %s28, [#allocation6], 128, 128, 8
    $region9: #{tpu_custom_call.1} parent=1 // pred_fallthru
      _
    // Predicated region
    $region10: #{tpu_custom_call.1} parent=1 // pred_check
      _
    $region11: #{tpu_custom_call.1} parent=1 // pred_check_branch
      %35 = sbr.rel (0) target = $region13
    $region12: #{tpu_custom_call.1} parent=1 // pred_region
      %37 = dma.done [#allocation3], 128
    $region13: #{tpu_custom_call.1} parent=1 // pred_fallthru
      _
    // Predicated region
    $region14: #{tpu_custom_call.1} parent=1 // pred_check
      _
    $region15: #{tpu_custom_call.1} parent=1 // pred_check_branch
      %39 = sbr.rel (0) target = $region17
    $region16: #{tpu_custom_call.1} parent=1 // pred_region
      %41 = dma.done [#allocation6], 2048
    $region17: #{tpu_custom_call.1} parent=1 // pred_fallthru
      _
    %v42 = vld [vmem:[#allocation2] sm:$0xff]
    %v43 = vld [vmem:[#allocation5] sm:$0xff]
    %v44 = vld [vmem:[#allocation5 + $0x8] sm:$0xff]
    %v45 = vld [vmem:[#allocation5 + $0x10] sm:$0xff]
    %v46 = vld [vmem:[#allocation5 + $0x18] sm:$0xff]
    %v47 = vld [vmem:[#allocation5 + $0x20] sm:$0xff]
    %v48 = vld [vmem:[#allocation5 + $0x28] sm:$0xff]
    %v49 = vld [vmem:[#allocation5 + $0x30] sm:$0xff]
    %v50 = vld [vmem:[#allocation5 + $0x38] sm:$0xff]
    %v51 = vld [vmem:[#allocation5 + $0x40] sm:$0xff]
    %v52 = vld [vmem:[#allocation5 + $0x48] sm:$0xff]
    %v53 = vld [vmem:[#allocation5 + $0x50] sm:$0xff]
    %v54 = vld [vmem:[#allocation5 + $0x58] sm:$0xff]
    %v55 = vld [vmem:[#allocation5 + $0x60] sm:$0xff]
    %v56 = vld [vmem:[#allocation5 + $0x68] sm:$0xff]
    %v57 = vld [vmem:[#allocation5 + $0x70] sm:$0xff]
    %v58 = vld [vmem:[#allocation5 + $0x78] sm:$0xff]
    %v59 = vmul.f32 %v42, %v42
    %60 = vadd.xlane.f32.xlu0 %v59
    %v61 = vpop.xlane.xlu0 %60
    %v62 = vmul.f32 %v43, %v43
    %v63 = vmul.f32 %v44, %v44
    %v64 = vmul.f32 %v45, %v45
    %v65 = vmul.f32 %v46, %v46
    %v66 = vmul.f32 %v47, %v47
    %v67 = vmul.f32 %v48, %v48
    %v68 = vmul.f32 %v49, %v49
    %v69 = vmul.f32 %v50, %v50
    %v70 = vmul.f32 %v51, %v51
    %v71 = vmul.f32 %v52, %v52
    %v72 = vmul.f32 %v53, %v53
    %v73 = vmul.f32 %v54, %v54
    %v74 = vmul.f32 %v55, %v55
    %v75 = vmul.f32 %v56, %v56
    %v76 = vmul.f32 %v57, %v57
    %v77 = vmul.f32 %v58, %v58
    %v78 = vadd.f32 %v62, %v63
    %v79 = vadd.f32 %v78, %v64
    %v80 = vadd.f32 %v79, %v65
    %v81 = vadd.f32 %v80, %v66
    %v82 = vadd.f32 %v81, %v67
    %v83 = vadd.f32 %v82, %v68
    %v84 = vadd.f32 %v83, %v69
    %v85 = vadd.f32 %v84, %v70
    %v86 = vadd.f32 %v85, %v71
    %v87 = vadd.f32 %v86, %v72
    %v88 = vadd.f32 %v87, %v73
    %v89 = vadd.f32 %v88, %v74
    %v90 = vadd.f32 %v89, %v75
    %v91 = vadd.f32 %v90, %v76
    %v92 = vadd.f32 %v91, %v77
    %v93 = vrot.slane %v92, 4
    %v94 = vadd.f32 %v92, %v93
    %v95 = vrot.slane %v94, 2
    %v96 = vadd.f32 %v94, %v95
    %v97 = vrot.slane %v96, 1
    %v98 = vadd.f32 %v96, %v97
    %99 = vmatpush.msra.mxu0 %v58
    %100 = vmatpush.msra.mxu0 %v57
    %101 = vmatpush.msra.mxu0 %v56
    %102 = vmatpush.msra.mxu0 %v55
    %103 = vmatpush.msra.mxu0 %v54
    %104 = vmatpush.msra.mxu0 %v53
    %105 = vmatpush.msra.mxu0 %v52
    %106 = vmatpush.msra.mxu0 %v51
    %107 = vmatpush.msra.mxu0 %v50
    %108 = vmatpush.msra.mxu0 %v49
    %109 = vmatpush.msra.mxu0 %v48
    %110 = vmatpush.msra.mxu0 %v47
    %111 = vmatpush.msra.mxu0 %v46
    %112 = vmatpush.msra.mxu0 %v45
    %113 = vmatpush.msra.mxu0 %v44
    %114 = vmatpush.msra.mxu0 %v43
    %115 = vmatmul.f32.gmra.mxu0 %v42
    %v116 = vpop.f32.mrf.mxu0
    %v117 = vadd.f32 0.0, %v116
    %118 = vdwg.mxu0
    %v119 = vmax.f32 %v61, 1e-24
    %v120 = vrsqrt.pop %v119
    %v121 = vmul.f32 %v120, %v119
    %v122 = vmul.f32 %v121, %v120
    %v123 = vmul.f32 0.5, %v122
    %v124 = vsub.f32 1.5, %v123
    %v125 = vmul.f32 %v120, %v124
    %vm126 = vweird.f32 %v119
    %vm127 = vweird.f32 %v120
    %vm128 = vmor %vm126, %vm127
    %v129 = vsel %vm128, %v120, %v125
    %v130 = vmax.f32 %v98, 1e-24
    %v131 = vrsqrt.pop %v130
    %v132 = vmul.f32 %v131, %v130
    %v133 = vmul.f32 %v132, %v131
    %v134 = vmul.f32 0.5, %v133
    %v135 = vsub.f32 1.5, %v134
    %v136 = vmul.f32 %v131, %v135
    %vm137 = vweird.f32 %v130
    %vm138 = vweird.f32 %v131
    %vm139 = vmor %vm137, %vm138
    %v140 = vsel %vm139, %v131, %v136
    %v141 = vmul.f32 %v117, %v129
    %v142 = vmul.f32 %v141, %v140
    %143 = vst [vmem:[#allocation7] sm:$0xff] %v142
    // Predicated region
    $region18: #{tpu_custom_call.1} parent=1 // pred_check
      _
    $region19: #{tpu_custom_call.1} parent=1 // pred_check_branch
      %145 = sbr.rel (0) target = $region21
    $region20: #{tpu_custom_call.1} parent=1 // pred_region
      %147 = vsyncadd [#allocation4], 0
      %s149 = sshll.u32 [#allocation7], 4
      %s150 = int_to_ptr.vmem [resolvable:$true] %s149
      %s151 = sshll.u32 %s2, 4
      %s152 = int_to_ptr.hbm [resolvable:$true] %s151
      %154 = dma.vmem_to_hbm [thread:$0]  %s150, 128, %s152, [#allocation4]
    $region21: #{tpu_custom_call.1} parent=1 // pred_fallthru
      _
    // Predicated region
    $region22: #{tpu_custom_call.1} parent=1 // pred_check
      _
    $region23: #{tpu_custom_call.1} parent=1 // pred_check_branch
      %156 = sbr.rel (0) target = $region25
    $region24: #{tpu_custom_call.1} parent=1 // pred_region
      %158 = dma.done [#allocation4], 128
    $region25: #{tpu_custom_call.1} parent=1 // pred_fallthru
      _
    %159 = vsyncpa [#allocation3], 1
    %160 = vsyncpa [#allocation6], 1
    %161 = vsyncpa [#allocation4], 1

</llo_original>
